<compile_context>
chip_gen: v7x
topology: tpu7x:2x2x1
jax: 0.10.0
libtpu: 0.0.40
codegen_flags: <defaults>
</compile_context>

<pallas_src>
import math

import jax
import jax.numpy as jnp
from jax.experimental import pallas as pl
from jax.experimental.pallas import tpu as pltpu


def _round_up(x, m):
    return ((x + m - 1) // m) * m


def _round_down(x, m):
    return (x // m) * m


def _broadcast_kernel(v_ref, o_ref):
    # v_ref: (1, D_pad) constant, resident in VMEM for the whole grid.
    # o_ref: (TB, D_pad) lane-dense output slab for this grid step.
    o_ref[...] = jnp.broadcast_to(v_ref[...], o_ref.shape)


def constant_network_forward(inputs, value):
    """Pallas equivalent of ConstantNetwork.forward.

    inputs: any array whose leading axis is the batch size B (contents unused).
    value:  constant (parameter or buffer) of arbitrary shape.
    returns: (B, *value.shape) array, value broadcast along the batch axis.
    """
    B = int(inputs.shape[0])
    val_shape = tuple(value.shape)
    dtype = value.dtype
    itemsize = jnp.dtype(dtype).itemsize

    # Flatten the constant to a lane-dense row, padded to a multiple of 128.
    D = int(math.prod(val_shape)) if val_shape else 1
    LANE = 128
    D_pad = _round_up(D, LANE)
    v_flat = value.reshape((-1,))
    if D_pad != D:
        v_flat = jnp.pad(v_flat, (0, D_pad - D))
    v2 = v_flat.reshape((1, D_pad))

    # Sublane alignment per dtype: f32 -> 8, bf16 -> 16, int8 -> 32.
    sub = max(8, 32 // itemsize)

    # Rows per grid step: target ~2 MiB output block (4 MiB double-buffered),
    # well under v5e's 16 MiB scoped default and v7x's 64 MiB physical VMEM.
    budget_rows = max(sub, (2 * 1024 * 1024) // (D_pad * itemsize))
    budget_rows = max(sub, _round_down(budget_rows, sub))
    # Keep at least 2 grid steps when the batch is large enough so the
    # "parallel" axis can shard across both v7x TensorCores.
    half_rows = _round_up(max(1, (B + 1) // 2), sub)
    TB = max(sub, min(budget_rows, half_rows))

    B_pad = _round_up(B, TB)
    grid = (B_pad // TB,)

    out_flat = pl.pallas_call(
        _broadcast_kernel,
        out_shape=jax.ShapeDtypeStruct((B_pad, D_pad), dtype),
        grid_spec=pltpu.PrefetchScalarGridSpec(
            num_scalar_prefetch=0,
            grid=grid,
            in_specs=[
                # Whole constant lives in VMEM for the entire grid — no
                # per-step re-DMA and no double-buffering of the input.
                pl.BlockSpec(memory_space=pltpu.MemorySpace.VMEM),
            ],
            out_specs=pl.BlockSpec((TB, D_pad), lambda i: (i, 0)),
        ),
        compiler_params=pltpu.CompilerParams(
            dimension_semantics=("parallel",),
            vmem_limit_bytes=32 * 1024 * 1024,
        ),
    )(v2)

    # Strip batch / lane padding and restore the original value shape.
    out = out_flat[:B, :D].reshape((B,) + val_shape)
    return out


if __name__ == "__main__":
    key = jax.random.PRNGKey(0)
    k_val, k_in = jax.random.split(key)

    # Deterministic "parameter" (the module's __init__ just stores `value`).
    C, H, W = 4, 16, 16
    value = jax.random.normal(k_val, (C, H, W), dtype=jnp.float32)

    # Inputs: only the batch dim matters (contents never affect the result).
    B = 2
    inputs = jax.random.normal(k_in, (B, C, H, W), dtype=jnp.float32)

    out = constant_network_forward(inputs, value)
    out = jax.block_until_ready(out)

    # Reference check: pure-JAX broadcast, same semantics as torch expand.
    ref = jnp.broadcast_to(value[None, ...], (B, C, H, W))
    assert out.shape == (B, C, H, W), out.shape
    assert out.dtype == value.dtype, out.dtype
    assert bool(jnp.array_equal(out, ref)), "mismatch vs reference broadcast"

    print("KERNEL_OK")
</pallas_src>

<mosaic_0001>
module attributes {stable_mosaic.version = 11 : i64} {
  func.func @_broadcast_kernel(%arg0: i32, %arg1: memref<1x1024xf32, #tpu.memory_space<vmem>>, %arg2: memref<8x1024xf32, #tpu.memory_space<vmem>>) attributes {dimension_semantics = [#tpu.dimension_semantics<parallel>], iteration_bounds = array<i64: 1>, scalar_prefetch = 0 : i64, scratch_operands = 0 : i64, tpu.core_type = #tpu.core_type<tc>, window_params = [{pipeline_mode = #tpu.pipeline_mode<synchronous>, transform_indices = @transform_0, window_bounds = array<i64: 1, 1024>}, {transform_indices = @transform_1, window_bounds = array<i64: 8, 1024>}]} {
    %c0 = arith.constant 0 : index
    %c0_0 = arith.constant 0 : index
    %0 = vector.load %arg1[%c0, %c0_0] : memref<1x1024xf32, #tpu.memory_space<vmem>>, vector<1x1024xf32>
    %1 = vector.shape_cast %0 : vector<1x1024xf32> to vector<1x1024xf32>
    %2 = vector.broadcast %1 : vector<1x1024xf32> to vector<8x1024xf32>
    %c0_1 = arith.constant 0 : index
    %c0_2 = arith.constant 0 : index
    %3 = vector.load %arg2[%c0_1, %c0_2] : memref<8x1024xf32, #tpu.memory_space<vmem>>, vector<8x1024xf32>
    tpu.vector_store %arg2[%c0_1, %c0_2], %2 {strides = array<i32>} : memref<8x1024xf32, #tpu.memory_space<vmem>>, vector<8x1024xf32>,
    return
  }
  func.func @transform_0(%arg0: i32) -> (i32, i32) {
    %c0_i32 = arith.constant 0 : i32
    %c0_i32_0 = arith.constant 0 : i32
    %c0_i32_1 = arith.constant 0 : i32
    return %c0_i32, %c0_i32_0 : i32, i32
  }
  func.func @transform_1(%arg0: i32) -> (i32, i32) {
    %c0_i32 = arith.constant 0 : i32
    %c0_i32_0 = arith.constant 0 : i32
    return %arg0, %c0_i32 : i32, i32
  }
}

</mosaic_0001>

<llo_original>
// kernel: tpu_custom_call.1
$region0: #{tpu_custom_call.1}
  #allocation0 [shape = 'u32[]', space=smem, size = 0x4, offset = 0x4, fixed_abs, tag = 'smem constant byte address 0x4 - core index']
  #allocation1 [shape = 'u32[144,128]{1,0:T(1,128)}', space=vmem, size = 0x12000, scoped, tag = 'internal scratch']
  %s0 = inlined_call_operand.hbm [shape: f32[1,1024], index: 0, kind: input, shape index: {}]
  %s1 = inlined_call_operand.hbm [shape: f32[8,1024], index: 1, kind: output, shape index: {}]
  %s2 = sld [smem:[#allocation0]]
  $region18: #{tpu_custom_call.1} parent=0
    _
  %s4 = ssub.s32 1, %s2
  %s5 = scalar_select 0, %s4, %s2
  $region1: #{tpu_custom_call.1} parent=0
    #allocation2 [shape = 'u8[4096]{0}', space=vmem, size = 0x1000, scoped, tag = 'input window, operand 0, single buffered']
    #allocation3 [shape = 's32[1]{0}', space=sflag, size = 0x4, scoped, tag = 'scoped memory for tpu_custom_call.1']
    #allocation4 [shape = 's32[1]{0}', space=sflag, size = 0x4, scoped, tag = 'scoped memory for tpu_custom_call.1']
    #allocation5 [shape = 'u8[32768]{0}', space=vmem, size = 0x8000, scoped, tag = 'output window, operand 0, single buffered']
    %6 = vsyncpa [#allocation3], 0
    %7 = vsyncpa [#allocation4], 0
    // Predicated region
    $region2: #{tpu_custom_call.1} parent=1 // pred_check
      _
    $region3: #{tpu_custom_call.1} parent=1 // pred_check_branch
      %9 = sbr.rel (0) target = $region5
    $region4: #{tpu_custom_call.1} parent=1 // pred_region
      %s11 = ssub.s32 128, 128
      %12 = vsyncadd [#allocation3], %s11
      %s14 = sshll.u32 [#allocation2], 4
      %s15 = int_to_ptr.vmem [resolvable:$true] %s14
      %17 = dma.hbm_to_vmem [thread:$0]  %s0, 128, %s15, [#allocation3]
    $region5: #{tpu_custom_call.1} parent=1 // pred_fallthru
      _
    // Predicated region
    $region6: #{tpu_custom_call.1} parent=1 // pred_check
      _
    $region7: #{tpu_custom_call.1} parent=1 // pred_check_branch
      %19 = sbr.rel (0) target = $region9
    $region8: #{tpu_custom_call.1} parent=1 // pred_region
      %20 = dma.done [#allocation3], 128
    $region9: #{tpu_custom_call.1} parent=1 // pred_fallthru
      _
    %v21 = vld [vmem:[#allocation2] sm:$0xff]
    %v23 = vlaneseq
    %v24 = vshrl.u32 %v23, 7
    %v25 = vsub.s32 0, %v24
    %v26 = vrot.slane %v21, %v25
    %v27 = vlaneseq
    %v28 = vshrl.u32 %v27, 7
    %v29 = vsub.s32 1, %v28
    %v30 = vrot.slane %v21, %v29
    %v31 = vlaneseq
    %v32 = vshrl.u32 %v31, 7
    %v33 = vsub.s32 2, %v32
    %v34 = vrot.slane %v21, %v33
    %v35 = vlaneseq
    %v36 = vshrl.u32 %v35, 7
    %v37 = vsub.s32 3, %v36
    %v38 = vrot.slane %v21, %v37
    %v39 = vlaneseq
    %v40 = vshrl.u32 %v39, 7
    %v41 = vsub.s32 4, %v40
    %v42 = vrot.slane %v21, %v41
    %v43 = vlaneseq
    %v44 = vshrl.u32 %v43, 7
    %v45 = vsub.s32 5, %v44
    %v46 = vrot.slane %v21, %v45
    %v47 = vlaneseq
    %v48 = vshrl.u32 %v47, 7
    %v49 = vsub.s32 6, %v48
    %v50 = vrot.slane %v21, %v49
    %v51 = vlaneseq
    %v52 = vshrl.u32 %v51, 7
    %v53 = vsub.s32 7, %v52
    %v54 = vrot.slane %v21, %v53
    %63 = vst [vmem:[#allocation5] sm:$0xff] %v26
    %64 = vst [vmem:[#allocation5 + $0x8] sm:$0xff] %v30
    %65 = vst [vmem:[#allocation5 + $0x10] sm:$0xff] %v34
    %66 = vst [vmem:[#allocation5 + $0x18] sm:$0xff] %v38
    %67 = vst [vmem:[#allocation5 + $0x20] sm:$0xff] %v42
    %68 = vst [vmem:[#allocation5 + $0x28] sm:$0xff] %v46
    %69 = vst [vmem:[#allocation5 + $0x30] sm:$0xff] %v50
    %70 = vst [vmem:[#allocation5 + $0x38] sm:$0xff] %v54
    // Predicated region
    $region10: #{tpu_custom_call.1} parent=1 // pred_check
      _
    $region11: #{tpu_custom_call.1} parent=1 // pred_check_branch
      %72 = sbr.rel (0) target = $region13
    $region12: #{tpu_custom_call.1} parent=1 // pred_region
      %s74 = ssub.s32 1024, 1024
      %75 = vsyncadd [#allocation4], %s74
      %s77 = sshll.u32 [#allocation5], 4
      %s78 = int_to_ptr.vmem [resolvable:$true] %s77
      %80 = dma.vmem_to_hbm [thread:$0]  %s78, 1024, %s1, [#allocation4]
    $region13: #{tpu_custom_call.1} parent=1 // pred_fallthru
      _
    // Predicated region
    $region14: #{tpu_custom_call.1} parent=1 // pred_check
      _
    $region15: #{tpu_custom_call.1} parent=1 // pred_check_branch
      %82 = sbr.rel (0) target = $region17
    $region16: #{tpu_custom_call.1} parent=1 // pred_region
      %83 = dma.done [#allocation4], 1024
    $region17: #{tpu_custom_call.1} parent=1 // pred_fallthru
      _
    %84 = vsyncpa [#allocation3], 1
    %85 = vsyncpa [#allocation4], 1

</llo_original>
